<compile_context>
chip_gen: v5e
topology: v5e:2x2
jax: 0.10.0
libtpu: 0.0.40
codegen_flags: <defaults>
</compile_context>

<pallas_src>
import jax
import jax.numpy as jnp
from jax.experimental import pallas as pl
from jax.experimental.pallas import tpu as pltpu


def _round_up(x, m):
    return ((x + m - 1) // m) * m


# --------------------------------------------------------------------------
# Kernels
# --------------------------------------------------------------------------
def _adapter_kernel_cond(x_ref, c_ref,
                         w1, b1, w2, b2,          # importance_estimator
                         w3, b3, w4, b4,          # condition_transform
                         wgx, wgc, bg,            # gate (split halves)
                         o_ref):
    x = x_ref[...]                   # native dtype (bf16 stays bf16 on MXU)
    c = c_ref[...]
    cdt = x.dtype

    # importance = sigmoid(relu(x @ W1 + b1) @ W2 + b2)
    h = jnp.maximum(
        jnp.dot(x, w1[...], preferred_element_type=jnp.float32) + b1[...], 0.0)
    importance = jax.nn.sigmoid(
        jnp.dot(h.astype(cdt), w2[...], preferred_element_type=jnp.float32)
        + b2[...])

    # condition = relu(c @ W3 + b3) @ W4 + b4
    hc = jnp.maximum(
        jnp.dot(c, w3[...], preferred_element_type=jnp.float32) + b3[...], 0.0)
    cond = jnp.dot(hc.astype(cdt), w4[...],
                   preferred_element_type=jnp.float32) + b4[...]

    # gate = sigmoid(concat([x, cond]) @ Wg.T + bg), split into x/cond halves
    gate = jax.nn.sigmoid(
        jnp.dot(x, wgx[...], preferred_element_type=jnp.float32)
        + jnp.dot(cond.astype(cdt), wgc[...],
                  preferred_element_type=jnp.float32)
        + bg[...])

    out = x.astype(jnp.float32) * importance * gate + cond * (1.0 - gate)
    o_ref[...] = out.astype(o_ref.dtype)


def _adapter_kernel_nocond(x_ref, w1, b1, w2, b2, o_ref):
    x = x_ref[...]
    cdt = x.dtype
    h = jnp.maximum(
        jnp.dot(x, w1[...], preferred_element_type=jnp.float32) + b1[...], 0.0)
    importance = jax.nn.sigmoid(
        jnp.dot(h.astype(cdt), w2[...], preferred_element_type=jnp.float32)
        + b2[...])
    o_ref[...] = (x.astype(jnp.float32) * importance).astype(o_ref.dtype)


# --------------------------------------------------------------------------
# Parameter init (matches nn.Linear shapes) and one-time kernel-layout prep
# --------------------------------------------------------------------------
def init_params(key, feature_dim, dtype=jnp.float32):
    D = feature_dim
    ks = jax.random.split(key, 5)
    s = 1.0 / jnp.sqrt(jnp.asarray(D, jnp.float32))
    s2 = 1.0 / jnp.sqrt(jnp.asarray(2 * D, jnp.float32))

    def lin(k, fan_in, fan_out, scale):
        kw, kb = jax.random.split(k)
        w = jax.random.uniform(kw, (fan_out, fan_in), dtype, -scale, scale)
        b = jax.random.uniform(kb, (fan_out,), dtype, -scale, scale)
        return w, b

    params = {}
    params["imp_w1"], params["imp_b1"] = lin(ks[0], D, D, s)
    params["imp_w2"], params["imp_b2"] = lin(ks[1], D, D, s)
    params["cond_w1"], params["cond_b1"] = lin(ks[2], D, D, s)
    params["cond_w2"], params["cond_b2"] = lin(ks[3], D, D, s)
    params["gate_w"], params["gate_b"] = lin(ks[4], 2 * D, D, s2)
    return params


def prepare_params(params, *, lane=128, dtype=None):
    """One-time conversion to kernel layout: weights transposed to (in, out),
    gate weight split into x/cond halves, zero-padded to a lane-dense Dp.
    Call this once outside the hot path (not per forward call)."""
    D = params["imp_w1"].shape[0]
    Dp = _round_up(D, lane)
    cast = (lambda a: a.astype(dtype)) if dtype is not None else (lambda a: a)

    def pad_w(w_t):                         # (D, D) -> (Dp, Dp)
        return cast(jnp.pad(w_t, ((0, Dp - D), (0, Dp - D))))

    def pad_b(b):                           # (D,)  -> (1, Dp)
        return cast(jnp.pad(b, (0, Dp - D)).reshape(1, Dp))

    kp = {"D": D, "Dp": Dp}
    kp["w1"] = pad_w(params["imp_w1"].T);  kp["b1"] = pad_b(params["imp_b1"])
    kp["w2"] = pad_w(params["imp_w2"].T);  kp["b2"] = pad_b(params["imp_b2"])
    kp["w3"] = pad_w(params["cond_w1"].T); kp["b3"] = pad_b(params["cond_b1"])
    kp["w4"] = pad_w(params["cond_w2"].T); kp["b4"] = pad_b(params["cond_b2"])
    kp["wgx"] = pad_w(params["gate_w"][:, :D].T)   # acts on features
    kp["wgc"] = pad_w(params["gate_w"][:, D:].T)   # acts on condition
    kp["bg"] = pad_b(params["gate_b"])
    return kp


# --------------------------------------------------------------------------
# Forward pass
# --------------------------------------------------------------------------
def dynamic_feature_adapter(kparams, features, condition_features=None, *,
                            tm=256):
    """Pallas forward pass of DynamicFeatureAdapter.

    kparams: output of prepare_params (kernel-layout, padded weights)."""
    D, Dp = kparams["D"], kparams["Dp"]
    assert features.shape[-1] == D
    orig_shape = features.shape
    x2d = features.reshape(-1, D)
    M = x2d.shape[0]
    itemsize = jnp.dtype(features.dtype).itemsize
    w_itemsize = jnp.dtype(kparams["w1"].dtype).itemsize

    # Row tile: large (amortize ~600-cycle step overhead, fill the MXU),
    # but clamped / rounded so tiny or ragged M still works.
    sub = 16 if features.dtype == jnp.bfloat16 else 8
    tm_eff = max(min(tm, _round_up(M, sub)), sub)
    tm_eff = _round_up(tm_eff, sub)
    Mp = _round_up(M, tm_eff)

    def pad_rows(a):
        pr, pc = Mp - a.shape[0], Dp - a.shape[1]
        return a if (pr == 0 and pc == 0) else jnp.pad(a, ((0, pr), (0, pc)))

    xp = pad_rows(x2d)
    grid = (Mp // tm_eff,)
    row_spec = pl.BlockSpec((tm_eff, Dp), lambda i: (i, 0))

    def full(shape):
        return pl.BlockSpec(shape, lambda i: (0, 0))

    compiler_params = pltpu.CompilerParams(
        dimension_semantics=("parallel",),
        vmem_limit_bytes=48 * 1024 * 1024,   # > v5e 16 MiB default, < v7x 64 MiB
    )

    if condition_features is None:
        cost = pl.CostEstimate(
            flops=4 * Mp * Dp * Dp,
            transcendentals=Mp * Dp,
            bytes_accessed=(2 * Mp * Dp) * itemsize
                           + (2 * Dp * Dp + 2 * Dp) * w_itemsize)
        out = pl.pallas_call(
            _adapter_kernel_nocond,
            out_shape=jax.ShapeDtypeStruct((Mp, Dp), features.dtype),
            grid_spec=pltpu.PrefetchScalarGridSpec(
                num_scalar_prefetch=0,
                grid=grid,
                in_specs=[row_spec,
                          full((Dp, Dp)), full((1, Dp)),
                          full((Dp, Dp)), full((1, Dp))],
                out_specs=row_spec,
            ),
            compiler_params=compiler_params,
            cost_estimate=cost,
        )(xp, kparams["w1"], kparams["b1"], kparams["w2"], kparams["b2"])
        return out[:M, :D].reshape(orig_shape)

    c2d = condition_features.reshape(-1, D)
    cp = pad_rows(c2d)
    cost = pl.CostEstimate(
        flops=12 * Mp * Dp * Dp,
        transcendentals=2 * Mp * Dp,
        bytes_accessed=(3 * Mp * Dp) * itemsize
                       + (6 * Dp * Dp + 5 * Dp) * w_itemsize)
    out = pl.pallas_call(
        _adapter_kernel_cond,
        out_shape=jax.ShapeDtypeStruct((Mp, Dp), features.dtype),
        grid_spec=pltpu.PrefetchScalarGridSpec(
            num_scalar_prefetch=0,
            grid=grid,
            in_specs=[row_spec, row_spec,
                      full((Dp, Dp)), full((1, Dp)),
                      full((Dp, Dp)), full((1, Dp)),
                      full((Dp, Dp)), full((1, Dp)),
                      full((Dp, Dp)), full((1, Dp)),
                      full((Dp, Dp)), full((Dp, Dp)), full((1, Dp))],
            out_specs=row_spec,
        ),
        compiler_params=compiler_params,
        cost_estimate=cost,
    )(xp, cp,
      kparams["w1"], kparams["b1"], kparams["w2"], kparams["b2"],
      kparams["w3"], kparams["b3"], kparams["w4"], kparams["b4"],
      kparams["wgx"], kparams["wgc"], kparams["bg"])
    return out[:M, :D].reshape(orig_shape)


# --------------------------------------------------------------------------
# Pure-JAX reference (matches the PyTorch forward)
# --------------------------------------------------------------------------
def _reference(params, features, condition_features=None):
    def lin(w, b, x):
        return x @ w.T + b

    h = jax.nn.relu(lin(params["imp_w1"], params["imp_b1"], features))
    importance = jax.nn.sigmoid(lin(params["imp_w2"], params["imp_b2"], h))
    if condition_features is None:
        return features * importance
    hc = jax.nn.relu(lin(params["cond_w1"], params["cond_b1"],
                         condition_features))
    cond = lin(params["cond_w2"], params["cond_b2"], hc)
    gate = jax.nn.sigmoid(
        lin(params["gate_w"], params["gate_b"],
            jnp.concatenate([features, cond], axis=-1)))
    return features * importance * gate + cond * (1.0 - gate)


if __name__ == "__main__":
    B, S, D = 2, 8, 32   # feature_dim = 32 (mid_dim unused in forward)
    key = jax.random.PRNGKey(0)
    kp_, kx, kc = jax.random.split(key, 3)

    params = init_params(kp_, D)
    kparams = prepare_params(params)          # one-time kernel-layout prep

    features = jax.random.normal(kx, (B, S, D), jnp.float32)
    condition = jax.random.normal(kc, (B, S, D), jnp.float32)

    # With condition_features
    out = jax.block_until_ready(
        dynamic_feature_adapter(kparams, features, condition))
    ref = _reference(params, features, condition)
    assert out.shape == features.shape
    assert jnp.allclose(out, ref, atol=1e-4, rtol=1e-4), "mismatch (cond path)"

    # Without condition_features
    out2 = jax.block_until_ready(
        dynamic_feature_adapter(kparams, features, None))
    ref2 = _reference(params, features, None)
    assert jnp.allclose(out2, ref2, atol=1e-4, rtol=1e-4), "mismatch (no-cond)"

    # Ragged row count (B*S not a multiple of 8) exercises the padding path.
    kx2, kc2 = jax.random.split(kx)
    f3 = jax.random.normal(kx2, (3, 7, D), jnp.float32)
    c3 = jax.random.normal(kc2, (3, 7, D), jnp.float32)
    out3 = jax.block_until_ready(dynamic_feature_adapter(kparams, f3, c3))
    ref3 = _reference(params, f3, c3)
    assert jnp.allclose(out3, ref3, atol=1e-4, rtol=1e-4), "mismatch (ragged)"

    print("KERNEL_OK")
</pallas_src>

<mosaic_0001>
module attributes {stable_mosaic.version = 11 : i64} {
  func.func @_adapter_kernel_cond(%arg0: i32, %arg1: memref<16x128xf32, #tpu.memory_space<vmem>>, %arg2: memref<16x128xf32, #tpu.memory_space<vmem>>, %arg3: memref<128x128xf32, #tpu.memory_space<vmem>>, %arg4: memref<1x128xf32, #tpu.memory_space<vmem>>, %arg5: memref<128x128xf32, #tpu.memory_space<vmem>>, %arg6: memref<1x128xf32, #tpu.memory_space<vmem>>, %arg7: memref<128x128xf32, #tpu.memory_space<vmem>>, %arg8: memref<1x128xf32, #tpu.memory_space<vmem>>, %arg9: memref<128x128xf32, #tpu.memory_space<vmem>>, %arg10: memref<1x128xf32, #tpu.memory_space<vmem>>, %arg11: memref<128x128xf32, #tpu.memory_space<vmem>>, %arg12: memref<128x128xf32, #tpu.memory_space<vmem>>, %arg13: memref<1x128xf32, #tpu.memory_space<vmem>>, %arg14: memref<16x128xf32, #tpu.memory_space<vmem>>) attributes {dimension_semantics = [#tpu.dimension_semantics<parallel>], iteration_bounds = array<i64: 1>, scalar_prefetch = 0 : i64, scratch_operands = 0 : i64, tpu.core_type = #tpu.core_type<tc>, window_params = [{transform_indices = @transform_0, window_bounds = array<i64: 16, 128>}, {transform_indices = @transform_1, window_bounds = array<i64: 16, 128>}, {pipeline_mode = #tpu.pipeline_mode<synchronous>, transform_indices = @transform_2, window_bounds = array<i64: 128, 128>}, {pipeline_mode = #tpu.pipeline_mode<synchronous>, transform_indices = @transform_3, window_bounds = array<i64: 1, 128>}, {pipeline_mode = #tpu.pipeline_mode<synchronous>, transform_indices = @transform_4, window_bounds = array<i64: 128, 128>}, {pipeline_mode = #tpu.pipeline_mode<synchronous>, transform_indices = @transform_5, window_bounds = array<i64: 1, 128>}, {pipeline_mode = #tpu.pipeline_mode<synchronous>, transform_indices = @transform_6, window_bounds = array<i64: 128, 128>}, {pipeline_mode = #tpu.pipeline_mode<synchronous>, transform_indices = @transform_7, window_bounds = array<i64: 1, 128>}, {pipeline_mode = #tpu.pipeline_mode<synchronous>, transform_indices = @transform_8, window_bounds = array<i64: 128, 128>}, {pipeline_mode = #tpu.pipeline_mode<synchronous>, transform_indices = @transform_9, window_bounds = array<i64: 1, 128>}, {pipeline_mode = #tpu.pipeline_mode<synchronous>, transform_indices = @transform_10, window_bounds = array<i64: 128, 128>}, {pipeline_mode = #tpu.pipeline_mode<synchronous>, transform_indices = @transform_11, window_bounds = array<i64: 128, 128>}, {pipeline_mode = #tpu.pipeline_mode<synchronous>, transform_indices = @transform_12, window_bounds = array<i64: 1, 128>}, {transform_indices = @transform_13, window_bounds = array<i64: 16, 128>}]} {
    %c0 = arith.constant 0 : index
    %c0_0 = arith.constant 0 : index
    %0 = vector.load %arg1[%c0, %c0_0] : memref<16x128xf32, #tpu.memory_space<vmem>>, vector<16x128xf32>
    %c0_1 = arith.constant 0 : index
    %c0_2 = arith.constant 0 : index
    %1 = vector.load %arg2[%c0_1, %c0_2] : memref<16x128xf32, #tpu.memory_space<vmem>>, vector<16x128xf32>
    %c0_3 = arith.constant 0 : index
    %c0_4 = arith.constant 0 : index
    %2 = vector.load %arg3[%c0_3, %c0_4] : memref<128x128xf32, #tpu.memory_space<vmem>>, vector<128x128xf32>
    %cst = arith.constant dense<0.000000e+00> : vector<16x128xf32>
    %3 = tpu.matmul %0, %2, %cst {dimension_numbers = #tpu.dot_dimension_numbers<[1], [0], [0], [1], [0, 0, 1, 1], [], []>} : vector<16x128xf32>, vector<128x128xf32>, vector<16x128xf32> -> vector<16x128xf32>
    %c0_5 = arith.constant 0 : index
    %c0_6 = arith.constant 0 : index
    %4 = vector.load %arg4[%c0_5, %c0_6] : memref<1x128xf32, #tpu.memory_space<vmem>>, vector<1x128xf32>
    %5 = vector.broadcast %4 : vector<1x128xf32> to vector<16x128xf32>
    %6 = arith.addf %3, %5 : vector<16x128xf32>
    %cst_7 = arith.constant 0.000000e+00 : f32
    %7 = vector.broadcast %cst_7 : f32 to vector<16x128xf32>
    %8 = arith.maximumf %6, %7 : vector<16x128xf32>
    %c0_8 = arith.constant 0 : index
    %c0_9 = arith.constant 0 : index
    %9 = vector.load %arg5[%c0_8, %c0_9] : memref<128x128xf32, #tpu.memory_space<vmem>>, vector<128x128xf32>
    %cst_10 = arith.constant dense<0.000000e+00> : vector<16x128xf32>
    %10 = tpu.matmul %8, %9, %cst_10 {dimension_numbers = #tpu.dot_dimension_numbers<[1], [0], [0], [1], [0, 0, 1, 1], [], []>} : vector<16x128xf32>, vector<128x128xf32>, vector<16x128xf32> -> vector<16x128xf32>
    %c0_11 = arith.constant 0 : index
    %c0_12 = arith.constant 0 : index
    %11 = vector.load %arg6[%c0_11, %c0_12] : memref<1x128xf32, #tpu.memory_space<vmem>>, vector<1x128xf32>
    %12 = vector.broadcast %11 : vector<1x128xf32> to vector<16x128xf32>
    %13 = arith.addf %10, %12 : vector<16x128xf32>
    %14 = arith.negf %13 : vector<16x128xf32>
    %15 = math.exp %14 : vector<16x128xf32>
    %cst_13 = arith.constant 1.000000e+00 : f32
    %16 = vector.broadcast %cst_13 : f32 to vector<16x128xf32>
    %17 = arith.addf %16, %15 : vector<16x128xf32>
    %18 = arith.divf %16, %17 : vector<16x128xf32>
    %c0_14 = arith.constant 0 : index
    %c0_15 = arith.constant 0 : index
    %19 = vector.load %arg7[%c0_14, %c0_15] : memref<128x128xf32, #tpu.memory_space<vmem>>, vector<128x128xf32>
    %cst_16 = arith.constant dense<0.000000e+00> : vector<16x128xf32>
    %20 = tpu.matmul %1, %19, %cst_16 {dimension_numbers = #tpu.dot_dimension_numbers<[1], [0], [0], [1], [0, 0, 1, 1], [], []>} : vector<16x128xf32>, vector<128x128xf32>, vector<16x128xf32> -> vector<16x128xf32>
    %c0_17 = arith.constant 0 : index
    %c0_18 = arith.constant 0 : index
    %21 = vector.load %arg8[%c0_17, %c0_18] : memref<1x128xf32, #tpu.memory_space<vmem>>, vector<1x128xf32>
    %22 = vector.broadcast %21 : vector<1x128xf32> to vector<16x128xf32>
    %23 = arith.addf %20, %22 : vector<16x128xf32>
    %cst_19 = arith.constant 0.000000e+00 : f32
    %24 = vector.broadcast %cst_19 : f32 to vector<16x128xf32>
    %25 = arith.maximumf %23, %24 : vector<16x128xf32>
    %c0_20 = arith.constant 0 : index
    %c0_21 = arith.constant 0 : index
    %26 = vector.load %arg9[%c0_20, %c0_21] : memref<128x128xf32, #tpu.memory_space<vmem>>, vector<128x128xf32>
    %cst_22 = arith.constant dense<0.000000e+00> : vector<16x128xf32>
    %27 = tpu.matmul %25, %26, %cst_22 {dimension_numbers = #tpu.dot_dimension_numbers<[1], [0], [0], [1], [0, 0, 1, 1], [], []>} : vector<16x128xf32>, vector<128x128xf32>, vector<16x128xf32> -> vector<16x128xf32>
    %c0_23 = arith.constant 0 : index
    %c0_24 = arith.constant 0 : index
    %28 = vector.load %arg10[%c0_23, %c0_24] : memref<1x128xf32, #tpu.memory_space<vmem>>, vector<1x128xf32>
    %29 = vector.broadcast %28 : vector<1x128xf32> to vector<16x128xf32>
    %30 = arith.addf %27, %29 : vector<16x128xf32>
    %c0_25 = arith.constant 0 : index
    %c0_26 = arith.constant 0 : index
    %31 = vector.load %arg11[%c0_25, %c0_26] : memref<128x128xf32, #tpu.memory_space<vmem>>, vector<128x128xf32>
    %cst_27 = arith.constant dense<0.000000e+00> : vector<16x128xf32>
    %32 = tpu.matmul %0, %31, %cst_27 {dimension_numbers = #tpu.dot_dimension_numbers<[1], [0], [0], [1], [0, 0, 1, 1], [], []>} : vector<16x128xf32>, vector<128x128xf32>, vector<16x128xf32> -> vector<16x128xf32>
    %c0_28 = arith.constant 0 : index
    %c0_29 = arith.constant 0 : index
    %33 = vector.load %arg12[%c0_28, %c0_29] : memref<128x128xf32, #tpu.memory_space<vmem>>, vector<128x128xf32>
    %cst_30 = arith.constant dense<0.000000e+00> : vector<16x128xf32>
    %34 = tpu.matmul %30, %33, %cst_30 {dimension_numbers = #tpu.dot_dimension_numbers<[1], [0], [0], [1], [0, 0, 1, 1], [], []>} : vector<16x128xf32>, vector<128x128xf32>, vector<16x128xf32> -> vector<16x128xf32>
    %35 = arith.addf %32, %34 : vector<16x128xf32>
    %c0_31 = arith.constant 0 : index
    %c0_32 = arith.constant 0 : index
    %36 = vector.load %arg13[%c0_31, %c0_32] : memref<1x128xf32, #tpu.memory_space<vmem>>, vector<1x128xf32>
    %37 = vector.broadcast %36 : vector<1x128xf32> to vector<16x128xf32>
    %38 = arith.addf %35, %37 : vector<16x128xf32>
    %39 = arith.negf %38 : vector<16x128xf32>
    %40 = math.exp %39 : vector<16x128xf32>
    %cst_33 = arith.constant 1.000000e+00 : f32
    %41 = vector.broadcast %cst_33 : f32 to vector<16x128xf32>
    %42 = arith.addf %41, %40 : vector<16x128xf32>
    %43 = arith.divf %41, %42 : vector<16x128xf32>
    %44 = arith.mulf %0, %18 : vector<16x128xf32>
    %45 = arith.mulf %44, %43 : vector<16x128xf32>
    %cst_34 = arith.constant 1.000000e+00 : f32
    %46 = vector.broadcast %cst_34 : f32 to vector<16x128xf32>
    %47 = arith.subf %46, %43 : vector<16x128xf32>
    %48 = arith.mulf %30, %47 : vector<16x128xf32>
    %49 = arith.addf %45, %48 : vector<16x128xf32>
    %c0_35 = arith.constant 0 : index
    %c0_36 = arith.constant 0 : index
    %50 = vector.load %arg14[%c0_35, %c0_36] : memref<16x128xf32, #tpu.memory_space<vmem>>, vector<16x128xf32>
    tpu.vector_store %arg14[%c0_35, %c0_36], %49 {strides = array<i32>} : memref<16x128xf32, #tpu.memory_space<vmem>>, vector<16x128xf32>,
    return
  }
  func.func @transform_0(%arg0: i32) -> (i32, i32) {
    %c0_i32 = arith.constant 0 : i32
    %c0_i32_0 = arith.constant 0 : i32
    return %arg0, %c0_i32 : i32, i32
  }
  func.func @transform_1(%arg0: i32) -> (i32, i32) {
    %c0_i32 = arith.constant 0 : i32
    %c0_i32_0 = arith.constant 0 : i32
    return %arg0, %c0_i32 : i32, i32
  }
  func.func @transform_2(%arg0: i32) -> (i32, i32) {
    %c0_i32 = arith.constant 0 : i32
    %c0_i32_0 = arith.constant 0 : i32
    %c0_i32_1 = arith.constant 0 : i32
    return %c0_i32, %c0_i32_0 : i32, i32
  }
  func.func @transform_3(%arg0: i32) -> (i32, i32) {
    %c0_i32 = arith.constant 0 : i32
    %c0_i32_0 = arith.constant 0 : i32
    %c0_i32_1 = arith.constant 0 : i32
    return %c0_i32, %c0_i32_0 : i32, i32
  }
  func.func @transform_4(%arg0: i32) -> (i32, i32) {
    %c0_i32 = arith.constant 0 : i32
    %c0_i32_0 = arith.constant 0 : i32
    %c0_i32_1 = arith.constant 0 : i32
    return %c0_i32, %c0_i32_0 : i32, i32
  }
  func.func @transform_5(%arg0: i32) -> (i32, i32) {
    %c0_i32 = arith.constant 0 : i32
    %c0_i32_0 = arith.constant 0 : i32
    %c0_i32_1 = arith.constant 0 : i32
    return %c0_i32, %c0_i32_0 : i32, i32
  }
  func.func @transform_6(%arg0: i32) -> (i32, i32) {
    %c0_i32 = arith.constant 0 : i32
    %c0_i32_0 = arith.constant 0 : i32
    %c0_i32_1 = arith.constant 0 : i32
    return %c0_i32, %c0_i32_0 : i32, i32
  }
  func.func @transform_7(%arg0: i32) -> (i32, i32) {
    %c0_i32 = arith.constant 0 : i32
    %c0_i32_0 = arith.constant 0 : i32
    %c0_i32_1 = arith.constant 0 : i32
    return %c0_i32, %c0_i32_0 : i32, i32
  }
  func.func @transform_8(%arg0: i32) -> (i32, i32) {
    %c0_i32 = arith.constant 0 : i32
    %c0_i32_0 = arith.constant 0 : i32
    %c0_i32_1 = arith.constant 0 : i32
    return %c0_i32, %c0_i32_0 : i32, i32
  }
  func.func @transform_9(%arg0: i32) -> (i32, i32) {
    %c0_i32 = arith.constant 0 : i32
    %c0_i32_0 = arith.constant 0 : i32
    %c0_i32_1 = arith.constant 0 : i32
    return %c0_i32, %c0_i32_0 : i32, i32
  }
  func.func @transform_10(%arg0: i32) -> (i32, i32) {
    %c0_i32 = arith.constant 0 : i32
    %c0_i32_0 = arith.constant 0 : i32
    %c0_i32_1 = arith.constant 0 : i32
    return %c0_i32, %c0_i32_0 : i32, i32
  }
  func.func @transform_11(%arg0: i32) -> (i32, i32) {
    %c0_i32 = arith.constant 0 : i32
    %c0_i32_0 = arith.constant 0 : i32
    %c0_i32_1 = arith.constant 0 : i32
    return %c0_i32, %c0_i32_0 : i32, i32
  }
  func.func @transform_12(%arg0: i32) -> (i32, i32) {
    %c0_i32 = arith.constant 0 : i32
    %c0_i32_0 = arith.constant 0 : i32
    %c0_i32_1 = arith.constant 0 : i32
    return %c0_i32, %c0_i32_0 : i32, i32
  }
  func.func @transform_13(%arg0: i32) -> (i32, i32) {
    %c0_i32 = arith.constant 0 : i32
    %c0_i32_0 = arith.constant 0 : i32
    return %arg0, %c0_i32 : i32, i32
  }
}

</mosaic_0001>

<llo_original>
// kernel: tpu_custom_call.1
$region0: #{tpu_custom_call.1}
  #allocation0 [shape = 'u32[]', space=smem, size = 0x4, offset = 0x4, fixed_abs, tag = 'smem constant byte address 0x4 - core index']
  #allocation1 [shape = 'u32[72,128]{1,0:T(1,128)}', space=vmem, size = 0x9000, scoped, tag = 'internal scratch']
  %s0 = inlined_call_operand.hbm [shape: f32[16,128], index: 0, kind: input, shape index: {}]
  %s1 = inlined_call_operand.hbm [shape: f32[16,128], index: 1, kind: input, shape index: {}]
  %s2 = inlined_call_operand.hbm [shape: f32[128,128], index: 2, kind: input, shape index: {}]
  %s3 = inlined_call_operand.vmem [shape: f32[1,128], index: 3, kind: input, shape index: {}]
  %s4 = inlined_call_operand.hbm [shape: f32[128,128], index: 4, kind: input, shape index: {}]
  %s5 = inlined_call_operand.vmem [shape: f32[1,128], index: 5, kind: input, shape index: {}]
  %s6 = inlined_call_operand.hbm [shape: f32[128,128], index: 6, kind: input, shape index: {}]
  %s7 = inlined_call_operand.vmem [shape: f32[1,128], index: 7, kind: input, shape index: {}]
  %s8 = inlined_call_operand.hbm [shape: f32[128,128], index: 8, kind: input, shape index: {}]
  %s9 = inlined_call_operand.vmem [shape: f32[1,128], index: 9, kind: input, shape index: {}]
  %s10 = inlined_call_operand.hbm [shape: f32[128,128], index: 10, kind: input, shape index: {}]
  %s11 = inlined_call_operand.hbm [shape: f32[128,128], index: 11, kind: input, shape index: {}]
  %s12 = inlined_call_operand.vmem [shape: f32[1,128], index: 12, kind: input, shape index: {}]
  %s13 = inlined_call_operand.hbm [shape: f32[16,128], index: 13, kind: output, shape index: {}]
  %s14 = sld [smem:[#allocation0]]
  $region94: #{tpu_custom_call.1} parent=0
    _
  %s16 = ssub.s32 1, %s14
  %s17 = scalar_select 0, %s16, %s14
  $region1: #{tpu_custom_call.1} parent=0
    #allocation2 [shape = 'u8[8192]{0}', space=vmem, size = 0x2000, scoped, tag = 'input window, operand 0, single buffered']
    #allocation3 [shape = 's32[1]{0}', space=sflag, size = 0x4, scoped, tag = 'scoped memory for tpu_custom_call.1']
    #allocation4 [shape = 's32[1]{0}', space=sflag, size = 0x4, scoped, tag = 'scoped memory for tpu_custom_call.1']
    #allocation5 [shape = 'u8[8192]{0}', space=vmem, size = 0x2000, scoped, tag = 'input window, operand 1, single buffered']
    #allocation6 [shape = 's32[1]{0}', space=sflag, size = 0x4, scoped, tag = 'scoped memory for tpu_custom_call.1']
    #allocation7 [shape = 'u8[65536]{0}', space=vmem, size = 0x10000, scoped, tag = 'input window, operand 2, single buffered']
    #allocation8 [shape = 'u8[65536]{0}', space=vmem, size = 0x10000, scoped, tag = 'input window, operand 4, single buffered']
    #allocation9 [shape = 's32[1]{0}', space=sflag, size = 0x4, scoped, tag = 'scoped memory for tpu_custom_call.1']
    #allocation10 [shape = 'u8[65536]{0}', space=vmem, size = 0x10000, scoped, tag = 'input window, operand 6, single buffered']
    #allocation11 [shape = 'u8[65536]{0}', space=vmem, size = 0x10000, scoped, tag = 'input window, operand 8, single buffered']
    #allocation12 [shape = 's32[1]{0}', space=sflag, size = 0x4, scoped, tag = 'scoped memory for tpu_custom_call.1']
    #allocation13 [shape = 'u8[65536]{0}', space=vmem, size = 0x10000, scoped, tag = 'input window, operand 10, single buffered']
    #allocation14 [shape = 'u8[65536]{0}', space=vmem, size = 0x10000, scoped, tag = 'input window, operand 11, single buffered']
    #allocation15 [shape = 's32[1]{0}', space=sflag, size = 0x4, scoped, tag = 'scoped memory for tpu_custom_call.1']
    #allocation16 [shape = 'u8[8192]{0}', space=vmem, size = 0x2000, scoped, tag = 'output window, operand 0, single buffered']
    %18 = vsyncpa [#allocation3], 0
    %19 = vsyncpa [#allocation6], 0
    %20 = vsyncpa [#allocation9], 0
    %21 = vsyncpa [#allocation12], 0
    %22 = vsyncpa [#allocation15], 0
    %23 = vsyncpa [#allocation4], 0
    // Predicated region
    $region2: #{tpu_custom_call.1} parent=1 // pred_check
      _
    $region3: #{tpu_custom_call.1} parent=1 // pred_check_branch
      %25 = sbr.rel (0) target = $region5
    $region4: #{tpu_custom_call.1} parent=1 // pred_region
      %27 = vsyncadd [#allocation3], 0
      %s28 = sshll.u32 %s0, 4
      %s29 = int_to_ptr.hbm [resolvable:$true] %s28
      %s30 = sshll.u32 [#allocation2], 4
      %s31 = int_to_ptr.vmem [resolvable:$true] %s30
      %36 = dma.hbm_to_vmem [thread:$0]  %s29, 256, %s31, [#allocation3], 128, 128, 8
    $region5: #{tpu_custom_call.1} parent=1 // pred_fallthru
      _
    // Predicated region
    $region6: #{tpu_custom_call.1} parent=1 // pred_check
      _
    $region7: #{tpu_custom_call.1} parent=1 // pred_check_branch
      %38 = sbr.rel (0) target = $region9
    $region8: #{tpu_custom_call.1} parent=1 // pred_region
      %40 = vsyncadd [#allocation6], 0
      %s41 = sshll.u32 %s1, 4
      %s42 = int_to_ptr.hbm [resolvable:$true] %s41
      %s43 = sshll.u32 [#allocation5], 4
      %s44 = int_to_ptr.vmem [resolvable:$true] %s43
      %49 = dma.hbm_to_vmem [thread:$0]  %s42, 256, %s44, [#allocation6], 128, 128, 8
    $region9: #{tpu_custom_call.1} parent=1 // pred_fallthru
      _
    // Predicated region
    $region10: #{tpu_custom_call.1} parent=1 // pred_check
      _
    $region11: #{tpu_custom_call.1} parent=1 // pred_check_branch
      %51 = sbr.rel (0) target = $region13
    $region12: #{tpu_custom_call.1} parent=1 // pred_region
      %53 = vsyncadd [#allocation6], 0
      %s54 = sshll.u32 %s2, 4
      %s55 = int_to_ptr.hbm [resolvable:$true] %s54
      %s56 = sshll.u32 [#allocation7], 4
      %s57 = int_to_ptr.vmem [resolvable:$true] %s56
      %62 = dma.hbm_to_vmem [thread:$0]  %s55, 2048, %s57, [#allocation6], 128, 128, 8
    $region13: #{tpu_custom_call.1} parent=1 // pred_fallthru
      _
    // Predicated region
    $region14: #{tpu_custom_call.1} parent=1 // pred_check
      _
    $region15: #{tpu_custom_call.1} parent=1 // pred_check_branch
      %64 = sbr.rel (0) target = $region17
    $region16: #{tpu_custom_call.1} parent=1 // pred_region
      _
    $region17: #{tpu_custom_call.1} parent=1 // pred_fallthru
      _
    // Predicated region
    $region18: #{tpu_custom_call.1} parent=1 // pred_check
      _
    $region19: #{tpu_custom_call.1} parent=1 // pred_check_branch
      %66 = sbr.rel (0) target = $region21
    $region20: #{tpu_custom_call.1} parent=1 // pred_region
      %68 = vsyncadd [#allocation9], 0
      %s69 = sshll.u32 %s4, 4
      %s70 = int_to_ptr.hbm [resolvable:$true] %s69
      %s71 = sshll.u32 [#allocation8], 4
      %s72 = int_to_ptr.vmem [resolvable:$true] %s71
      %77 = dma.hbm_to_vmem [thread:$0]  %s70, 2048, %s72, [#allocation9], 128, 128, 8
    $region21: #{tpu_custom_call.1} parent=1 // pred_fallthru
      _
    // Predicated region
    $region22: #{tpu_custom_call.1} parent=1 // pred_check
      _
    $region23: #{tpu_custom_call.1} parent=1 // pred_check_branch
      %79 = sbr.rel (0) target = $region25
    $region24: #{tpu_custom_call.1} parent=1 // pred_region
      _
    $region25: #{tpu_custom_call.1} parent=1 // pred_fallthru
      _
    // Predicated region
    $region26: #{tpu_custom_call.1} parent=1 // pred_check
      _
    $region27: #{tpu_custom_call.1} parent=1 // pred_check_branch
      %81 = sbr.rel (0) target = $region29
    $region28: #{tpu_custom_call.1} parent=1 // pred_region
      %83 = vsyncadd [#allocation9], 0
      %s84 = sshll.u32 %s6, 4
      %s85 = int_to_ptr.hbm [resolvable:$true] %s84
      %s86 = sshll.u32 [#allocation10], 4
      %s87 = int_to_ptr.vmem [resolvable:$true] %s86
      %92 = dma.hbm_to_vmem [thread:$0]  %s85, 2048, %s87, [#allocation9], 128, 128, 8
    $region29: #{tpu_custom_call.1} parent=1 // pred_fallthru
      _
    // Predicated region
    $region30: #{tpu_custom_call.1} parent=1 // pred_check
      _
    $region31: #{tpu_custom_call.1} parent=1 // pred_check_branch
      %94 = sbr.rel (0) target = $region33
    $region32: #{tpu_custom_call.1} parent=1 // pred_region
      _
    $region33: #{tpu_custom_call.1} parent=1 // pred_fallthru
      _
    // Predicated region
    $region34: #{tpu_custom_call.1} parent=1 // pred_check
      _
    $region35: #{tpu_custom_call.1} parent=1 // pred_check_branch
      %96 = sbr.rel (0) target = $region37
    $region36: #{tpu_custom_call.1} parent=1 // pred_region
      %98 = vsyncadd [#allocation12], 0
      %s99 = sshll.u32 %s8, 4
      %s100 = int_to_ptr.hbm [resolvable:$true] %s99
      %s101 = sshll.u32 [#allocation11], 4
      %s102 = int_to_ptr.vmem [resolvable:$true] %s101
      %107 = dma.hbm_to_vmem [thread:$0]  %s100, 2048, %s102, [#allocation12], 128, 128, 8
    $region37: #{tpu_custom_call.1} parent=1 // pred_fallthru
      _
    // Predicated region
    $region38: #{tpu_custom_call.1} parent=1 // pred_check
      _
    $region39: #{tpu_custom_call.1} parent=1 // pred_check_branch
      %109 = sbr.rel (0) target = $region41
    $region40: #{tpu_custom_call.1} parent=1 // pred_region
      _
    $region41: #{tpu_custom_call.1} parent=1 // pred_fallthru
      _
    // Predicated region
    $region42: #{tpu_custom_call.1} parent=1 // pred_check
      _
    $region43: #{tpu_custom_call.1} parent=1 // pred_check_branch
      %111 = sbr.rel (0) target = $region45
    $region44: #{tpu_custom_call.1} parent=1 // pred_region
      %113 = vsyncadd [#allocation12], 0
      %s114 = sshll.u32 %s10, 4
      %s115 = int_to_ptr.hbm [resolvable:$true] %s114
      %s116 = sshll.u32 [#allocation13], 4
      %s117 = int_to_ptr.vmem [resolvable:$true] %s116
      %122 = dma.hbm_to_vmem [thread:$0]  %s115, 2048, %s117, [#allocation12], 128, 128, 8
    $region45: #{tpu_custom_call.1} parent=1 // pred_fallthru
      _
    // Predicated region
    $region46: #{tpu_custom_call.1} parent=1 // pred_check
      _
    $region47: #{tpu_custom_call.1} parent=1 // pred_check_branch
      %124 = sbr.rel (0) target = $region49
    $region48: #{tpu_custom_call.1} parent=1 // pred_region
      %126 = vsyncadd [#allocation15], 0
      %s127 = sshll.u32 %s11, 4
      %s128 = int_to_ptr.hbm [resolvable:$true] %s127
      %s129 = sshll.u32 [#allocation14], 4
      %s130 = int_to_ptr.vmem [resolvable:$true] %s129
      %135 = dma.hbm_to_vmem [thread:$0]  %s128, 2048, %s130, [#allocation15], 128, 128, 8
    $region49: #{tpu_custom_call.1} parent=1 // pred_fallthru
      _
    // Predicated region
    $region50: #{tpu_custom_call.1} parent=1 // pred_check
      _
    $region51: #{tpu_custom_call.1} parent=1 // pred_check_branch
      %137 = sbr.rel (0) target = $region53
    $region52: #{tpu_custom_call.1} parent=1 // pred_region
      _
    $region53: #{tpu_custom_call.1} parent=1 // pred_fallthru
      _
    // Predicated region
    $region54: #{tpu_custom_call.1} parent=1 // pred_check
      _
    $region55: #{tpu_custom_call.1} parent=1 // pred_check_branch
      %139 = sbr.rel (0) target = $region57
    $region56: #{tpu_custom_call.1} parent=1 // pred_region
      %141 = dma.done [#allocation3], 256
    $region57: #{tpu_custom_call.1} parent=1 // pred_fallthru
      _
    // Predicated region
    $region58: #{tpu_custom_call.1} parent=1 // pred_check
      _
    $region59: #{tpu_custom_call.1} parent=1 // pred_check_branch
      %143 = sbr.rel (0) target = $region61
    $region60: #{tpu_custom_call.1} parent=1 // pred_region
      %145 = dma.done [#allocation6], 256
    $region61: #{tpu_custom_call.1} parent=1 // pred_fallthru
      _
    // Predicated region
    $region62: #{tpu_custom_call.1} parent=1 // pred_check
      _
    $region63: #{tpu_custom_call.1} parent=1 // pred_check_branch
      %147 = sbr.rel (0) target = $region65
    $region64: #{tpu_custom_call.1} parent=1 // pred_region
      %149 = dma.done [#allocation6], 2048
    $region65: #{tpu_custom_call.1} parent=1 // pred_fallthru
      _
    // Predicated region
    $region66: #{tpu_custom_call.1} parent=1 // pred_check
      _
    $region67: #{tpu_custom_call.1} parent=1 // pred_check_branch
      %151 = sbr.rel (0) target = $region69
    $region68: #{tpu_custom_call.1} parent=1 // pred_region
      %153 = dma.done [#allocation9], 2048
    $region69: #{tpu_custom_call.1} parent=1 // pred_fallthru
      _
    // Predicated region
    $region70: #{tpu_custom_call.1} parent=1 // pred_check
      _
    $region71: #{tpu_custom_call.1} parent=1 // pred_check_branch
      %155 = sbr.rel (0) target = $region73
    $region72: #{tpu_custom_call.1} parent=1 // pred_region
      %157 = dma.done [#allocation9], 2048
    $region73: #{tpu_custom_call.1} parent=1 // pred_fallthru
      _
    // Predicated region
    $region74: #{tpu_custom_call.1} parent=1 // pred_check
      _
    $region75: #{tpu_custom_call.1} parent=1 // pred_check_branch
      %159 = sbr.rel (0) target = $region77
    $region76: #{tpu_custom_call.1} parent=1 // pred_region
      %161 = dma.done [#allocation12], 2048
    $region77: #{tpu_custom_call.1} parent=1 // pred_fallthru
      _
    // Predicated region
    $region78: #{tpu_custom_call.1} parent=1 // pred_check
      _
    $region79: #{tpu_custom_call.1} parent=1 // pred_check_branch
      %163 = sbr.rel (0) target = $region81
    $region80: #{tpu_custom_call.1} parent=1 // pred_region
      %165 = dma.done [#allocation12], 2048
    $region81: #{tpu_custom_call.1} parent=1 // pred_fallthru
      _
    // Predicated region
    $region82: #{tpu_custom_call.1} parent=1 // pred_check
      _
    $region83: #{tpu_custom_call.1} parent=1 // pred_check_branch
      %167 = sbr.rel (0) target = $region85
    $region84: #{tpu_custom_call.1} parent=1 // pred_region
      %169 = dma.done [#allocation15], 2048
    $region85: #{tpu_custom_call.1} parent=1 // pred_fallthru
      _
    %v170 = vld [vmem:[#allocation2] sm:$0xff]
    %v171 = vld [vmem:[#allocation2 + $0x8] sm:$0xff]
    %v172 = vld [vmem:[#allocation5] sm:$0xff]
    %v173 = vld [vmem:[#allocation5 + $0x8] sm:$0xff]
    %v174 = vld [vmem:[#allocation7] sm:$0xff]
    %v175 = vld [vmem:[#allocation7 + $0x8] sm:$0xff]
    %v176 = vld [vmem:[#allocation7 + $0x10] sm:$0xff]
    %v177 = vld [vmem:[#allocation7 + $0x18] sm:$0xff]
    %v178 = vld [vmem:[#allocation7 + $0x20] sm:$0xff]
    %v179 = vld [vmem:[#allocation7 + $0x28] sm:$0xff]
    %v180 = vld [vmem:[#allocation7 + $0x30] sm:$0xff]
    %v181 = vld [vmem:[#allocation7 + $0x38] sm:$0xff]
    %v182 = vld [vmem:[#allocation7 + $0x40] sm:$0xff]
    %v183 = vld [vmem:[#allocation7 + $0x48] sm:$0xff]
    %v184 = vld [vmem:[#allocation7 + $0x50] sm:$0xff]
    %v185 = vld [vmem:[#allocation7 + $0x58] sm:$0xff]
    %v186 = vld [vmem:[#allocation7 + $0x60] sm:$0xff]
    %v187 = vld [vmem:[#allocation7 + $0x68] sm:$0xff]
    %v188 = vld [vmem:[#allocation7 + $0x70] sm:$0xff]
    %v189 = vld [vmem:[#allocation7 + $0x78] sm:$0xff]
    %v190 = vld [vmem:[%s3] sm:$0x1]
    %v192 = vperm.slane %v190, 0
    %194 = vmatpush.msra.mxu0 %v189
    %195 = vmatpush.msra.mxu0 %v188
    %196 = vmatpush.msra.mxu0 %v187
    %197 = vmatpush.msra.mxu0 %v186
    %198 = vmatpush.msra.mxu0 %v185
    %199 = vmatpush.msra.mxu0 %v184
    %200 = vmatpush.msra.mxu0 %v183
    %201 = vmatpush.msra.mxu0 %v182
    %202 = vmatpush.msra.mxu0 %v181
    %203 = vmatpush.msra.mxu0 %v180
    %204 = vmatpush.msra.mxu0 %v179
    %205 = vmatpush.msra.mxu0 %v178
    %206 = vmatpush.msra.mxu0 %v177
    %207 = vmatpush.msra.mxu0 %v176
    %208 = vmatpush.msra.mxu0 %v175
    %209 = vmatpush.msra.mxu0 %v174
    %210 = vmatmul.f32.gmra.mxu0 %v170
    %v211 = vpop.f32.mrf.mxu0
    %v212 = vadd.f32 %v192, %v211
    %213 = vmatmul.f32.gmra.mxu0 %v171
    %v214 = vpop.f32.mrf.mxu0
    %v215 = vadd.f32 %v192, %v214
    %216 = vdwg.mxu0
    %v217 = vmax.f32 %v212, 0.0
    %v218 = vmax.f32 %v215, 0.0
    %v219 = vld [vmem:[#allocation8] sm:$0xff]
    %v220 = vld [vmem:[#allocation8 + $0x8] sm:$0xff]
    %v221 = vld [vmem:[#allocation8 + $0x10] sm:$0xff]
    %v222 = vld [vmem:[#allocation8 + $0x18] sm:$0xff]
    %v223 = vld [vmem:[#allocation8 + $0x20] sm:$0xff]
    %v224 = vld [vmem:[#allocation8 + $0x28] sm:$0xff]
    %v225 = vld [vmem:[#allocation8 + $0x30] sm:$0xff]
    %v226 = vld [vmem:[#allocation8 + $0x38] sm:$0xff]
    %v227 = vld [vmem:[#allocation8 + $0x40] sm:$0xff]
    %v228 = vld [vmem:[#allocation8 + $0x48] sm:$0xff]
    %v229 = vld [vmem:[#allocation8 + $0x50] sm:$0xff]
    %v230 = vld [vmem:[#allocation8 + $0x58] sm:$0xff]
    %v231 = vld [vmem:[#allocation8 + $0x60] sm:$0xff]
    %v232 = vld [vmem:[#allocation8 + $0x68] sm:$0xff]
    %v233 = vld [vmem:[#allocation8 + $0x70] sm:$0xff]
    %v234 = vld [vmem:[#allocation8 + $0x78] sm:$0xff]
    %v235 = vld [vmem:[%s5] sm:$0x1]
    %v237 = vperm.slane %v235, 0
    %239 = vmatpush.msra.mxu0 %v234
    %240 = vmatpush.msra.mxu0 %v233
    %241 = vmatpush.msra.mxu0 %v232
    %242 = vmatpush.msra.mxu0 %v231
    %243 = vmatpush.msra.mxu0 %v230
    %244 = vmatpush.msra.mxu0 %v229
    %245 = vmatpush.msra.mxu0 %v228
    %246 = vmatpush.msra.mxu0 %v227
    %247 = vmatpush.msra.mxu0 %v226
    %248 = vmatpush.msra.mxu0 %v225
    %249 = vmatpush.msra.mxu0 %v224
    %250 = vmatpush.msra.mxu0 %v223
    %251 = vmatpush.msra.mxu0 %v222
    %252 = vmatpush.msra.mxu0 %v221
    %253 = vmatpush.msra.mxu0 %v220
    %254 = vmatpush.msra.mxu0 %v219
    %255 = vmatmul.f32.gmra.mxu0 %v217
    %v256 = vpop.f32.mrf.mxu0
    %v257 = vadd.f32 %v237, %v256
    %258 = vmatmul.f32.gmra.mxu0 %v218
    %v259 = vpop.f32.mrf.mxu0
    %v260 = vadd.f32 %v237, %v259
    %261 = vdwg.mxu0
    %v262 = vxor.u32 %v257, 2147483648
    %v263 = vxor.u32 %v260, 2147483648
    %v264 = vmul.f32 %v262, 1.442695
    %v265 = vpow.pop %v264
    %v266 = vmul.f32 %v263, 1.442695
    %v267 = vpow.pop %v266
    %v268 = vadd.f32 %v265, 1.0
    %v269 = vadd.f32 %v267, 1.0
    %v270 = vrcp.pop %v268
    %v271 = vmul.f32 %v268, %v270
    %v272 = vsub.f32 1.0, %v271
    %v273 = vmul.f32 %v270, %v272
    %v274 = vadd.f32 %v270, %v273
    %vm275 = vweird.f32 %v268
    %vm276 = vweird.f32 %v270
    %vm277 = vmor %vm275, %vm276
    %v278 = vsel %vm277, %v270, %v274
    %v279 = vand.u32 2147483647, %v268
    %vm280 = vcmp.eq.f32.partialorder %v279, 8.507059e+37
    %v281 = vand.u32 %v268, 2147483648
    %v282 = vor.u32 1.1754944e-38, %v281
    %v283 = vsel %vm280, %v282, %v278
    %v284 = vmul.f32 1.0, %v283
    %v285 = vrcp.pop %v269
    %v286 = vmul.f32 %v269, %v285
    %v287 = vsub.f32 1.0, %v286
    %v288 = vmul.f32 %v285, %v287
    %v289 = vadd.f32 %v285, %v288
    %vm290 = vweird.f32 %v269
    %vm291 = vweird.f32 %v285
    %vm292 = vmor %vm290, %vm291
    %v293 = vsel %vm292, %v285, %v289
    %v294 = vand.u32 2147483647, %v269
    %vm295 = vcmp.eq.f32.partialorder %v294, 8.507059e+37
    %v296 = vand.u32 %v269, 2147483648
    %v297 = vor.u32 1.1754944e-38, %v296
    %v298 = vsel %vm295, %v297, %v293
    %v299 = vmul.f32 1.0, %v298
    %v300 = vld [vmem:[#allocation10] sm:$0xff]
    %v301 = vld [vmem:[#allocation10 + $0x8] sm:$0xff]
    %v302 = vld [vmem:[#allocation10 + $0x10] sm:$0xff]
    %v303 = vld [vmem:[#allocation10 + $0x18] sm:$0xff]
    %v304 = vld [vmem:[#allocation10 + $0x20] sm:$0xff]
    %v305 = vld [vmem:[#allocation10 + $0x28] sm:$0xff]
    %v306 = vld [vmem:[#allocation10 + $0x30] sm:$0xff]
    %v307 = vld [vmem:[#allocation10 + $0x38] sm:$0xff]
    %v308 = vld [vmem:[#allocation10 + $0x40] sm:$0xff]
    %v309 = vld [vmem:[#allocation10 + $0x48] sm:$0xff]
    %v310 = vld [vmem:[#allocation10 + $0x50] sm:$0xff]
    %v311 = vld [vmem:[#allocation10 + $0x58] sm:$0xff]
    %v312 = vld [vmem:[#allocation10 + $0x60] sm:$0xff]
    %v313 = vld [vmem:[#allocation10 + $0x68] sm:$0xff]
    %v314 = vld [vmem:[#allocation10 + $0x70] sm:$0xff]
    %v315 = vld [vmem:[#allocation10 + $0x78] sm:$0xff]
    %v316 = vld [vmem:[%s7] sm:$0x1]
    %v318 = vperm.slane %v316, 0
    %320 = vmatpush.msra.mxu0 %v315
    %321 = vmatpush.msra.mxu0 %v314
    %322 = vmatpush.msra.mxu0 %v313
    %323 = vmatpush.msra.mxu0 %v312
    %324 = vmatpush.msra.mxu0 %v311
    %325 = vmatpush.msra.mxu0 %v310
    %326 = vmatpush.msra.mxu0 %v309
    %327 = vmatpush.msra.mxu0 %v308
    %328 = vmatpush.msra.mxu0 %v307
    %329 = vmatpush.msra.mxu0 %v306
    %330 = vmatpush.msra.mxu0 %v305
    %331 = vmatpush.msra.mxu0 %v304
    %332 = vmatpush.msra.mxu0 %v303
    %333 = vmatpush.msra.mxu0 %v302
    %334 = vmatpush.msra.mxu0 %v301
    %335 = vmatpush.msra.mxu0 %v300
    %336 = vmatmul.f32.gmra.mxu0 %v172
    %v337 = vpop.f32.mrf.mxu0
    %v338 = vadd.f32 %v318, %v337
    %339 = vmatmul.f32.gmra.mxu0 %v173
    %v340 = vpop.f32.mrf.mxu0
    %v341 = vadd.f32 %v318, %v340
    %342 = vdwg.mxu0
    %v343 = vmax.f32 %v338, 0.0
    %v344 = vmax.f32 %v341, 0.0
    %v345 = vld [vmem:[#allocation11] sm:$0xff]
    %v346 = vld [vmem:[#allocation11 + $0x8] sm:$0xff]
    %v347 = vld [vmem:[#allocation11 + $0x10] sm:$0xff]
    %v348 = vld [vmem:[#allocation11 + $0x18] sm:$0xff]
    %v349 = vld [vmem:[#allocation11 + $0x20] sm:$0xff]
    %v350 = vld [vmem:[#allocation11 + $0x28] sm:$0xff]
    %v351 = vld [vmem:[#allocation11 + $0x30] sm:$0xff]
    %v352 = vld [vmem:[#allocation11 + $0x38] sm:$0xff]
    %v353 = vld [vmem:[#allocation11 + $0x40] sm:$0xff]
    %v354 = vld [vmem:[#allocation11 + $0x48] sm:$0xff]
    %v355 = vld [vmem:[#allocation11 + $0x50] sm:$0xff]
    %v356 = vld [vmem:[#allocation11 + $0x58] sm:$0xff]
    %v357 = vld [vmem:[#allocation11 + $0x60] sm:$0xff]
    %v358 = vld [vmem:[#allocation11 + $0x68] sm:$0xff]
    %v359 = vld [vmem:[#allocation11 + $0x70] sm:$0xff]
    %v360 = vld [vmem:[#allocation11 + $0x78] sm:$0xff]
    %v361 = vld [vmem:[%s9] sm:$0x1]
    %v363 = vperm.slane %v361, 0
    %365 = vmatpush.msra.mxu0 %v360
    %366 = vmatpush.msra.mxu0 %v359
    %367 = vmatpush.msra.mxu0 %v358
    %368 = vmatpush.msra.mxu0 %v357
    %369 = vmatpush.msra.mxu0 %v356
    %370 = vmatpush.msra.mxu0 %v355
    %371 = vmatpush.msra.mxu0 %v354
    %372 = vmatpush.msra.mxu0 %v353
    %373 = vmatpush.msra.mxu0 %v352
    %374 = vmatpush.msra.mxu0 %v351
    %375 = vmatpush.msra.mxu0 %v350
    %376 = vmatpush.msra.mxu0 %v349
    %377 = vmatpush.msra.mxu0 %v348
    %378 = vmatpush.msra.mxu0 %v347
    %379 = vmatpush.msra.mxu0 %v346
    %380 = vmatpush.msra.mxu0 %v345
    %381 = vmatmul.f32.gmra.mxu0 %v343
    %v382 = vpop.f32.mrf.mxu0
    %v383 = vadd.f32 %v363, %v382
    %384 = vmatmul.f32.gmra.mxu0 %v344
    %v385 = vpop.f32.mrf.mxu0
    %v386 = vadd.f32 %v363, %v385
    %387 = vdwg.mxu0
    %v388 = vld [vmem:[#allocation13] sm:$0xff]
    %v389 = vld [vmem:[#allocation13 + $0x8] sm:$0xff]
    %v390 = vld [vmem:[#allocation13 + $0x10] sm:$0xff]
    %v391 = vld [vmem:[#allocation13 + $0x18] sm:$0xff]
    %v392 = vld [vmem:[#allocation13 + $0x20] sm:$0xff]
    %v393 = vld [vmem:[#allocation13 + $0x28] sm:$0xff]
    %v394 = vld [vmem:[#allocation13 + $0x30] sm:$0xff]
    %v395 = vld [vmem:[#allocation13 + $0x38] sm:$0xff]
    %v396 = vld [vmem:[#allocation13 + $0x40] sm:$0xff]
    %v397 = vld [vmem:[#allocation13 + $0x48] sm:$0xff]
    %v398 = vld [vmem:[#allocation13 + $0x50] sm:$0xff]
    %v399 = vld [vmem:[#allocation13 + $0x58] sm:$0xff]
    %v400 = vld [vmem:[#allocation13 + $0x60] sm:$0xff]
    %v401 = vld [vmem:[#allocation13 + $0x68] sm:$0xff]
    %v402 = vld [vmem:[#allocation13 + $0x70] sm:$0xff]
    %v403 = vld [vmem:[#allocation13 + $0x78] sm:$0xff]
    %v404 = vld [vmem:[#allocation14] sm:$0xff]
    %v405 = vld [vmem:[#allocation14 + $0x8] sm:$0xff]
    %v406 = vld [vmem:[#allocation14 + $0x10] sm:$0xff]
    %v407 = vld [vmem:[#allocation14 + $0x18] sm:$0xff]
    %v408 = vld [vmem:[#allocation14 + $0x20] sm:$0xff]
    %v409 = vld [vmem:[#allocation14 + $0x28] sm:$0xff]
    %v410 = vld [vmem:[#allocation14 + $0x30] sm:$0xff]
    %v411 = vld [vmem:[#allocation14 + $0x38] sm:$0xff]
    %v412 = vld [vmem:[#allocation14 + $0x40] sm:$0xff]
    %v413 = vld [vmem:[#allocation14 + $0x48] sm:$0xff]
    %v414 = vld [vmem:[#allocation14 + $0x50] sm:$0xff]
    %v415 = vld [vmem:[#allocation14 + $0x58] sm:$0xff]
    %v416 = vld [vmem:[#allocation14 + $0x60] sm:$0xff]
    %v417 = vld [vmem:[#allocation14 + $0x68] sm:$0xff]
    %v418 = vld [vmem:[#allocation14 + $0x70] sm:$0xff]
    %v419 = vld [vmem:[#allocation14 + $0x78] sm:$0xff]
    %420 = vmatpush.msra.mxu0 %v419
    %421 = vmatpush.msra.mxu0 %v418
    %422 = vmatpush.msra.mxu0 %v417
    %423 = vmatpush.msra.mxu0 %v416
    %424 = vmatpush.msra.mxu0 %v415
    %425 = vmatpush.msra.mxu0 %v414
    %426 = vmatpush.msra.mxu0 %v413
    %427 = vmatpush.msra.mxu0 %v412
    %428 = vmatpush.msra.mxu0 %v411
    %429 = vmatpush.msra.mxu0 %v410
    %430 = vmatpush.msra.mxu0 %v409
    %431 = vmatpush.msra.mxu0 %v408
    %432 = vmatpush.msra.mxu0 %v407
    %433 = vmatpush.msra.mxu0 %v406
    %434 = vmatpush.msra.mxu0 %v405
    %435 = vmatpush.msra.mxu0 %v404
    %436 = vmatmul.f32.gmra.mxu0 %v383
    %v437 = vpop.f32.mrf.mxu0
    %v438 = vadd.f32 0.0, %v437
    %439 = vmatmul.f32.gmra.mxu0 %v386
    %v440 = vpop.f32.mrf.mxu0
    %v441 = vadd.f32 0.0, %v440
    %442 = vdwg.mxu0
    %443 = vmatpush.msra.mxu0 %v403
    %444 = vmatpush.msra.mxu0 %v402
    %445 = vmatpush.msra.mxu0 %v401
    %446 = vmatpush.msra.mxu0 %v400
    %447 = vmatpush.msra.mxu0 %v399
    %448 = vmatpush.msra.mxu0 %v398
    %449 = vmatpush.msra.mxu0 %v397
    %450 = vmatpush.msra.mxu0 %v396
    %451 = vmatpush.msra.mxu0 %v395
    %452 = vmatpush.msra.mxu0 %v394
    %453 = vmatpush.msra.mxu0 %v393
    %454 = vmatpush.msra.mxu0 %v392
    %455 = vmatpush.msra.mxu0 %v391
    %456 = vmatpush.msra.mxu0 %v390
    %457 = vmatpush.msra.mxu0 %v389
    %458 = vmatpush.msra.mxu0 %v388
    %459 = vmatmul.f32.gmra.mxu0 %v170
    %v460 = vpop.f32.mrf.mxu0
    %v461 = vadd.f32 %v438, %v460
    %462 = vmatmul.f32.gmra.mxu0 %v171
    %v463 = vpop.f32.mrf.mxu0
    %v464 = vadd.f32 %v441, %v463
    %465 = vdwg.mxu0
    %v466 = vld [vmem:[%s12] sm:$0x1]
    %v468 = vperm.slane %v466, 0
    %v470 = vadd.f32 %v461, %v468
    %v471 = vadd.f32 %v464, %v468
    %v472 = vxor.u32 %v470, 2147483648
    %v473 = vxor.u32 %v471, 2147483648
    %v474 = vmul.f32 %v472, 1.442695
    %v475 = vpow.pop %v474
    %v476 = vmul.f32 %v473, 1.442695
    %v477 = vpow.pop %v476
    %v478 = vadd.f32 %v475, 1.0
    %v479 = vadd.f32 %v477, 1.0
    %v480 = vrcp.pop %v478
    %v481 = vmul.f32 %v478, %v480
    %v482 = vsub.f32 1.0, %v481
    %v483 = vmul.f32 %v480, %v482
    %v484 = vadd.f32 %v480, %v483
    %vm485 = vweird.f32 %v478
    %vm486 = vweird.f32 %v480
    %vm487 = vmor %vm485, %vm486
    %v488 = vsel %vm487, %v480, %v484
    %v489 = vand.u32 2147483647, %v478
    %vm490 = vcmp.eq.f32.partialorder %v489, 8.507059e+37
    %v491 = vand.u32 %v478, 2147483648
    %v492 = vor.u32 1.1754944e-38, %v491
    %v493 = vsel %vm490, %v492, %v488
    %v494 = vmul.f32 1.0, %v493
    %v495 = vrcp.pop %v479
    %v496 = vmul.f32 %v479, %v495
    %v497 = vsub.f32 1.0, %v496
    %v498 = vmul.f32 %v495, %v497
    %v499 = vadd.f32 %v495, %v498
    %vm500 = vweird.f32 %v479
    %vm501 = vweird.f32 %v495
    %vm502 = vmor %vm500, %vm501
    %v503 = vsel %vm502, %v495, %v499
    %v504 = vand.u32 2147483647, %v479
    %vm505 = vcmp.eq.f32.partialorder %v504, 8.507059e+37
    %v506 = vand.u32 %v479, 2147483648
    %v507 = vor.u32 1.1754944e-38, %v506
    %v508 = vsel %vm505, %v507, %v503
    %v509 = vmul.f32 1.0, %v508
    %v510 = vmul.f32 %v170, %v284
    %v511 = vmul.f32 %v171, %v299
    %v512 = vmul.f32 %v510, %v494
    %v513 = vmul.f32 %v511, %v509
    %v514 = vsub.f32 1.0, %v494
    %v515 = vsub.f32 1.0, %v509
    %v516 = vmul.f32 %v383, %v514
    %v517 = vmul.f32 %v386, %v515
    %v518 = vadd.f32 %v512, %v516
    %v519 = vadd.f32 %v513, %v517
    %520 = vst [vmem:[#allocation16] sm:$0xff] %v518
    %521 = vst [vmem:[#allocation16 + $0x8] sm:$0xff] %v519
    // Predicated region
    $region86: #{tpu_custom_call.1} parent=1 // pred_check
      _
    $region87: #{tpu_custom_call.1} parent=1 // pred_check_branch
      %523 = sbr.rel (0) target = $region89
    $region88: #{tpu_custom_call.1} parent=1 // pred_region
      %525 = vsyncadd [#allocation4], 0
      %s526 = sshll.u32 [#allocation16], 4
      %s527 = int_to_ptr.vmem [resolvable:$true] %s526
      %s528 = sshll.u32 %s13, 4
      %s529 = int_to_ptr.hbm [resolvable:$true] %s528
      %534 = dma.vmem_to_hbm [thread:$0]  %s527, 256, %s529, [#allocation4], 128, 128, 8
    $region89: #{tpu_custom_call.1} parent=1 // pred_fallthru
      _
    // Predicated region
    $region90: #{tpu_custom_call.1} parent=1 // pred_check
      _
    $region91: #{tpu_custom_call.1} parent=1 // pred_check_branch
      %536 = sbr.rel (0) target = $region93
    $region92: #{tpu_custom_call.1} parent=1 // pred_region
      %538 = dma.done [#allocation4], 256
    $region93: #{tpu_custom_call.1} parent=1 // pred_fallthru
      _
    %539 = vsyncpa [#allocation3], 1
    %540 = vsyncpa [#allocation6], 1
    %541 = vsyncpa [#allocation9], 1
    %542 = vsyncpa [#allocation12], 1
    %543 = vsyncpa [#allocation15], 1
    %544 = vsyncpa [#allocation4], 1

</llo_original>
